<compile_context>
chip_gen: v5e
topology: v5e:2x2
jax: 0.10.0
libtpu: 0.0.40
codegen_flags: <defaults>
</compile_context>

<pallas_src>
import functools

import jax
import jax.numpy as jnp
from jax import lax
from jax.experimental import pallas as pl
from jax.experimental.pallas import tpu as pltpu

EPS = 1e-5  # torch.nn.LayerNorm default


# ----------------------------------------------------------------------------
# Stateless dropout hash (plain int32 VPU ops only -> portable to interpret mode)
# ----------------------------------------------------------------------------
def _wrap_i32(x: int) -> int:
    """Wrap a python uint32 constant into int32 range (two's complement)."""
    return ((x + 0x80000000) & 0xFFFFFFFF) - 0x80000000


_C1 = _wrap_i32(0x9E3779B1)
_C2 = _wrap_i32(0x85EBCA6B)
_C3 = _wrap_i32(0xC2B2AE35)


def _hash31(idx, seed):
    """Per-element hash of (global element index, seed) -> 31 uniform bits.

    murmur3-style multiply / xor-shift mixer.  The sign bit is masked before
    every right shift so the arithmetic `>>` behaves like a logical shift; only
    plain int32 adds/multiplies/xors/shifts are used, so it lowers on TPU and
    in interpret mode (unlike pltpu.prng_seed / prng_random_bits).
    """
    h = idx * jnp.int32(_C1) + seed
    h = h & jnp.int32(0x7FFFFFFF)
    h = h ^ (h >> 15)
    h = h * jnp.int32(_C2)
    h = h & jnp.int32(0x7FFFFFFF)
    h = h ^ (h >> 13)
    h = h * jnp.int32(_C3)
    h = h & jnp.int32(0x7FFFFFFF)
    h = h ^ (h >> 16)
    return h


# ----------------------------------------------------------------------------
# Fused SublayerConnection kernel: out = x + dropout(LayerNorm(x) @ W + b)
# ----------------------------------------------------------------------------
def _make_kernel(p: float, tm: int, d: int):
    keep_scale = 1.0 / (1.0 - p) if p < 1.0 else 0.0
    drop_thresh = min(int(p * (1 << 31)), (1 << 31) - 1)  # drop iff hash < thresh

    def kernel(seed_ref, x_ref, gamma_ref, beta_ref, w_ref, bias_ref, o_ref):
        # ---- LayerNorm over the last (lane) axis, f32 accumulation ----
        x = x_ref[...].astype(jnp.float32)                              # (tm, d)
        mean = jnp.mean(x, axis=-1, keepdims=True)
        cen = x - mean
        var = jnp.mean(cen * cen, axis=-1, keepdims=True)
        xn = cen * lax.rsqrt(var + EPS)
        xn = xn * gamma_ref[...].astype(jnp.float32) + beta_ref[...].astype(jnp.float32)

        # ---- sublayer stand-in: Linear(d, d) on the MXU ----
        # bf16 operands (W is stored in bf16), f32 accumulation.
        y = jnp.dot(xn.astype(jnp.bfloat16), w_ref[...],
                    preferred_element_type=jnp.float32)
        y = y + bias_ref[...].astype(jnp.float32)                       # (tm, d)

        # ---- inverted dropout: integer threshold compare on a stateless hash ----
        if p > 0.0:
            row = lax.broadcasted_iota(jnp.int32, (tm, d), 0) + pl.program_id(0) * tm
            col = lax.broadcasted_iota(jnp.int32, (tm, d), 1)
            bits = _hash31(row * d + col, seed_ref[0])   # keyed by GLOBAL element index
            y = jnp.where(bits >= drop_thresh, y * jnp.float32(keep_scale), 0.0)
        # TODO(synk): bit-exact replication of torch.nn.Dropout's RNG stream is not possible.

        # ---- residual add ----
        o_ref[...] = (x + y).astype(o_ref.dtype)

    return kernel


def _pick_tm(n_rows: int, d: int) -> int:
    """Largest row tile (multiple of 8) dividing n_rows that fits the VMEM budget.

    Budget ~8 MiB for the double-buffered f32 input + output tiles (~16*d
    bytes/row), leaving room for the resident bf16 weight and scratch.
    """
    budget = 8 * 1024 * 1024
    max_rows = max(8, budget // (16 * d))
    for cand in (512, 384, 256, 192, 128, 64, 32, 16, 8):
        if cand <= max_rows and n_rows % cand == 0:
            return cand
    return 8


@functools.partial(jax.jit, static_argnames=("p",))
def _sublayer_connection(x, gamma, beta, w, bias, seed_arr, *, p: float):
    """Fused SublayerConnection.  x: (B, S, D) f32.  w: (D, D) = torch weight.T."""
    B, S, D = x.shape
    M = B * S
    assert M % 8 == 0, "batch*seq must be a multiple of 8"
    tm = _pick_tm(M, D)

    x2 = x.reshape(M, D)
    gamma2 = gamma.reshape(1, D).astype(jnp.float32)
    beta2 = beta.reshape(1, D).astype(jnp.float32)
    bias2 = bias.reshape(1, D).astype(jnp.float32)
    w_bf16 = w.astype(jnp.bfloat16)   # bf16 MXU operand, halves resident-weight VMEM

    grid_spec = pltpu.PrefetchScalarGridSpec(
        num_scalar_prefetch=1,                      # dropout seed lands in SMEM
        grid=(M // tm,),
        in_specs=[
            pl.BlockSpec((tm, D), lambda i, seed: (i, 0)),   # x row tile
            pl.BlockSpec((1, D), lambda i, seed: (0, 0)),    # gamma
            pl.BlockSpec((1, D), lambda i, seed: (0, 0)),    # beta
            pl.BlockSpec((D, D), lambda i, seed: (0, 0)),    # W (bf16, resident)
            pl.BlockSpec((1, D), lambda i, seed: (0, 0)),    # bias
        ],
        out_specs=pl.BlockSpec((tm, D), lambda i, seed: (i, 0)),
    )
    # TODO(synk): for very large D (>= ~4096) add a second grid axis over W's output
    # columns (BlockSpec((D, tn), ...)), compute LayerNorm only at j == 0 under
    # pl.when into a (tm, D) VMEM scratch, and keep the row axis outermost/parallel.

    out2 = pl.pallas_call(
        _make_kernel(p, tm, D),
        out_shape=jax.ShapeDtypeStruct((M, D), x.dtype),
        grid_spec=grid_spec,
        compiler_params=pltpu.CompilerParams(
            # Row tiles are fully independent -> shard across v7x's 2 TensorCores.
            dimension_semantics=("parallel",),
            vmem_limit_bytes=64 * 1024 * 1024,
        ),
    )(seed_arr, x2, gamma2, beta2, w_bf16, bias2)

    return out2.reshape(B, S, D)


def sublayer_connection(x, gamma, beta, w, bias, seed: int, *, p: float):
    seed_arr = jnp.asarray([seed], dtype=jnp.int32)
    return _sublayer_connection(x, gamma, beta, w, bias, seed_arr, p=p)


# ----------------------------------------------------------------------------
# DecoderLayer = three chained fused SublayerConnection blocks
# ----------------------------------------------------------------------------
def init_decoder_layer_params(key, dim):
    """Three SublayerConnection blocks; each injected sublayer is a Linear(dim, dim)."""
    params = []
    for sub_key in jax.random.split(key, 3):
        kw, kb = jax.random.split(sub_key)
        params.append({
            "gamma": jnp.ones((dim,), jnp.float32),   # nn.LayerNorm default init
            "beta": jnp.zeros((dim,), jnp.float32),
            "w": jax.random.normal(kw, (dim, dim), jnp.float32) / jnp.sqrt(dim),
            "b": 0.01 * jax.random.normal(kb, (dim,), jnp.float32),
        })
    return params


def decoder_layer(x, encoder_out, src_mask, tgt_mask, params, seed: int, *, p: float):
    """DecoderLayer.forward: x -> sublayer0 -> sublayer1 -> sublayer2.

    TODO(synk): self_attn / src_attn / feed_forward are injected nn.Modules with no
    definition in the spec; Linear(dim, dim) stand-ins are used, so encoder_out /
    src_mask / tgt_mask are accepted but unused.
    """
    del encoder_out, src_mask, tgt_mask
    for k, pr in enumerate(params):
        # Distinct well-separated seed per sublayer; the in-kernel hash mixes seed
        # with the global element index, so streams never alias across tiles/calls.
        x = sublayer_connection(x, pr["gamma"], pr["beta"], pr["w"], pr["b"],
                                seed + 7919 * (k + 1), p=p)
    return x


# ----------------------------------------------------------------------------
# Pure-JAX reference (no dropout) for the fused LN + Linear + residual path
# ----------------------------------------------------------------------------
def _reference_sublayer_no_dropout(x, gamma, beta, w, bias):
    xf = x.astype(jnp.float32)
    mean = jnp.mean(xf, axis=-1, keepdims=True)
    var = jnp.mean((xf - mean) ** 2, axis=-1, keepdims=True)
    xn = (xf - mean) * lax.rsqrt(var + EPS) * gamma + beta
    # mirror the kernel's bf16 MXU operands (f32 accumulation)
    xn16 = xn.astype(jnp.bfloat16).astype(jnp.float32)
    w16 = w.astype(jnp.bfloat16).astype(jnp.float32)
    return x + (jnp.einsum("bsd,de->bse", xn16, w16) + bias)


if __name__ == "__main__":
    B, S, D = 2, 64, 128          # D multiple of 128 -> lane-dense tiles & stores
    dropout_p = 0.1

    key = jax.random.PRNGKey(0)
    kx, km, kp = jax.random.split(key, 3)

    x = jax.random.normal(kx, (B, S, D), dtype=jnp.float32)
    encoder_out = jax.random.normal(km, (B, S, D), dtype=jnp.float32)
    src_mask = jnp.ones((B, 1, S), dtype=jnp.float32)
    tgt_mask = jnp.tril(jnp.ones((S, S), dtype=jnp.float32))[None]

    params = init_decoder_layer_params(kp, D)

    # (1) Fused LN -> Linear -> residual path vs pure-JAX reference (p = 0, eval mode).
    out0 = sublayer_connection(x, params[0]["gamma"], params[0]["beta"],
                               params[0]["w"], params[0]["b"], 0, p=0.0)
    ref0 = _reference_sublayer_no_dropout(x, params[0]["gamma"], params[0]["beta"],
                                          params[0]["w"], params[0]["b"])
    jax.block_until_ready(out0)
    err = float(jnp.max(jnp.abs(out0 - ref0)))
    assert err < 1e-3, f"sublayer mismatch vs reference: {err}"

    # (2) Dropout sanity (train mode): deterministic per seed, ~p of positions dropped.
    d1 = sublayer_connection(x, params[0]["gamma"], params[0]["beta"],
                             params[0]["w"], params[0]["b"], 7, p=dropout_p)
    d2 = sublayer_connection(x, params[0]["gamma"], params[0]["beta"],
                             params[0]["w"], params[0]["b"], 7, p=dropout_p)
    jax.block_until_ready((d1, d2))
    assert bool(jnp.all(d1 == d2)), "dropout mask not deterministic for a fixed seed"
    drop_frac = float(jnp.mean((d1 == x).astype(jnp.float32)))   # dropped -> out == x
    assert 0.02 < drop_frac < 0.25, f"dropout fraction {drop_frac} far from {dropout_p}"

    # (3) Full DecoderLayer forward (3 fused sublayer blocks), training mode.
    out = decoder_layer(x, encoder_out, src_mask, tgt_mask, params, 1234, p=dropout_p)
    jax.block_until_ready(out)
    assert out.shape == (B, S, D)
    assert bool(jnp.all(jnp.isfinite(out)))

    print("KERNEL_OK")
</pallas_src>

<mosaic_0001>
module attributes {stable_mosaic.version = 11 : i64} {
  func.func @kernel(%arg0: i32, %arg1: memref<1xi32, #tpu.memory_space<smem>>, %arg2: memref<128x128xf32, #tpu.memory_space<vmem>>, %arg3: memref<1x128xf32, #tpu.memory_space<vmem>>, %arg4: memref<1x128xf32, #tpu.memory_space<vmem>>, %arg5: memref<128x128xbf16, #tpu.memory_space<vmem>>, %arg6: memref<1x128xf32, #tpu.memory_space<vmem>>, %arg7: memref<128x128xf32, #tpu.memory_space<vmem>>) attributes {dimension_semantics = [#tpu.dimension_semantics<parallel>], iteration_bounds = array<i64: 1>, scalar_prefetch = 1 : i64, scratch_operands = 0 : i64, tpu.core_type = #tpu.core_type<tc>, window_params = [{transform_indices = @transform_0, window_bounds = array<i64: 128, 128>}, {pipeline_mode = #tpu.pipeline_mode<synchronous>, transform_indices = @transform_1, window_bounds = array<i64: 1, 128>}, {pipeline_mode = #tpu.pipeline_mode<synchronous>, transform_indices = @transform_2, window_bounds = array<i64: 1, 128>}, {pipeline_mode = #tpu.pipeline_mode<synchronous>, transform_indices = @transform_3, window_bounds = array<i64: 128, 128>}, {pipeline_mode = #tpu.pipeline_mode<synchronous>, transform_indices = @transform_4, window_bounds = array<i64: 1, 128>}, {transform_indices = @transform_5, window_bounds = array<i64: 128, 128>}]} {
    %c0 = arith.constant 0 : index
    %c0_0 = arith.constant 0 : index
    %0 = vector.load %arg2[%c0, %c0_0] : memref<128x128xf32, #tpu.memory_space<vmem>>, vector<128x128xf32>
    %cst = arith.constant dense<0.000000e+00> : vector<128xf32>
    %1 = vector.multi_reduction <add>, %0, %cst [1] : vector<128x128xf32> to vector<128xf32>
    %2 = vector.shape_cast %1 : vector<128xf32> to vector<128x1xf32>
    %cst_1 = arith.constant 1.280000e+02 : f32
    %3 = vector.broadcast %cst_1 : f32 to vector<128x1xf32>
    %4 = arith.divf %2, %3 : vector<128x1xf32>
    %5 = vector.broadcast %4 : vector<128x1xf32> to vector<128x128xf32>
    %6 = arith.subf %0, %5 : vector<128x128xf32>
    %7 = arith.mulf %6, %6 : vector<128x128xf32>
    %cst_2 = arith.constant dense<0.000000e+00> : vector<128xf32>
    %8 = vector.multi_reduction <add>, %7, %cst_2 [1] : vector<128x128xf32> to vector<128xf32>
    %9 = vector.shape_cast %8 : vector<128xf32> to vector<128x1xf32>
    %cst_3 = arith.constant 1.280000e+02 : f32
    %10 = vector.broadcast %cst_3 : f32 to vector<128x1xf32>
    %11 = arith.divf %9, %10 : vector<128x1xf32>
    %cst_4 = arith.constant 9.99999974E-6 : f32
    %12 = vector.broadcast %cst_4 : f32 to vector<128x1xf32>
    %13 = arith.addf %11, %12 : vector<128x1xf32>
    %14 = math.rsqrt %13 : vector<128x1xf32>
    %15 = vector.broadcast %14 : vector<128x1xf32> to vector<128x128xf32>
    %16 = arith.mulf %6, %15 : vector<128x128xf32>
    %c0_5 = arith.constant 0 : index
    %c0_6 = arith.constant 0 : index
    %17 = vector.load %arg3[%c0_5, %c0_6] : memref<1x128xf32, #tpu.memory_space<vmem>>, vector<1x128xf32>
    %18 = vector.broadcast %17 : vector<1x128xf32> to vector<128x128xf32>
    %19 = arith.mulf %16, %18 : vector<128x128xf32>
    %c0_7 = arith.constant 0 : index
    %c0_8 = arith.constant 0 : index
    %20 = vector.load %arg4[%c0_7, %c0_8] : memref<1x128xf32, #tpu.memory_space<vmem>>, vector<1x128xf32>
    %21 = vector.broadcast %20 : vector<1x128xf32> to vector<128x128xf32>
    %22 = arith.addf %19, %21 : vector<128x128xf32>
    %23 = arith.truncf %22 : vector<128x128xf32> to vector<128x128xbf16>
    %c0_9 = arith.constant 0 : index
    %c0_10 = arith.constant 0 : index
    %24 = vector.load %arg5[%c0_9, %c0_10] : memref<128x128xbf16, #tpu.memory_space<vmem>>, vector<128x128xbf16>
    %cst_11 = arith.constant dense<0.000000e+00> : vector<128x128xf32>
    %25 = tpu.matmul %23, %24, %cst_11 {dimension_numbers = #tpu.dot_dimension_numbers<[1], [0], [0], [1], [0, 0, 1, 1], [], []>} : vector<128x128xbf16>, vector<128x128xbf16>, vector<128x128xf32> -> vector<128x128xf32>
    %c0_12 = arith.constant 0 : index
    %c0_13 = arith.constant 0 : index
    %26 = vector.load %arg6[%c0_12, %c0_13] : memref<1x128xf32, #tpu.memory_space<vmem>>, vector<1x128xf32>
    %27 = vector.broadcast %26 : vector<1x128xf32> to vector<128x128xf32>
    %28 = arith.addf %25, %27 : vector<128x128xf32>
    %29 = arith.addf %0, %28 : vector<128x128xf32>
    %c0_14 = arith.constant 0 : index
    %c0_15 = arith.constant 0 : index
    %30 = vector.load %arg7[%c0_14, %c0_15] : memref<128x128xf32, #tpu.memory_space<vmem>>, vector<128x128xf32>
    tpu.vector_store %arg7[%c0_14, %c0_15], %29 {strides = array<i32>} : memref<128x128xf32, #tpu.memory_space<vmem>>, vector<128x128xf32>,
    return
  }
  func.func @transform_0(%arg0: i32, %arg1: memref<1xi32, #tpu.memory_space<smem>>) -> (i32, i32) {
    %c0_i32 = arith.constant 0 : i32
    %c0_i32_0 = arith.constant 0 : i32
    return %arg0, %c0_i32 : i32, i32
  }
  func.func @transform_1(%arg0: i32, %arg1: memref<1xi32, #tpu.memory_space<smem>>) -> (i32, i32) {
    %c0_i32 = arith.constant 0 : i32
    %c0_i32_0 = arith.constant 0 : i32
    %c0_i32_1 = arith.constant 0 : i32
    return %c0_i32, %c0_i32_0 : i32, i32
  }
  func.func @transform_2(%arg0: i32, %arg1: memref<1xi32, #tpu.memory_space<smem>>) -> (i32, i32) {
    %c0_i32 = arith.constant 0 : i32
    %c0_i32_0 = arith.constant 0 : i32
    %c0_i32_1 = arith.constant 0 : i32
    return %c0_i32, %c0_i32_0 : i32, i32
  }
  func.func @transform_3(%arg0: i32, %arg1: memref<1xi32, #tpu.memory_space<smem>>) -> (i32, i32) {
    %c0_i32 = arith.constant 0 : i32
    %c0_i32_0 = arith.constant 0 : i32
    %c0_i32_1 = arith.constant 0 : i32
    return %c0_i32, %c0_i32_0 : i32, i32
  }
  func.func @transform_4(%arg0: i32, %arg1: memref<1xi32, #tpu.memory_space<smem>>) -> (i32, i32) {
    %c0_i32 = arith.constant 0 : i32
    %c0_i32_0 = arith.constant 0 : i32
    %c0_i32_1 = arith.constant 0 : i32
    return %c0_i32, %c0_i32_0 : i32, i32
  }
  func.func @transform_5(%arg0: i32, %arg1: memref<1xi32, #tpu.memory_space<smem>>) -> (i32, i32) {
    %c0_i32 = arith.constant 0 : i32
    %c0_i32_0 = arith.constant 0 : i32
    return %arg0, %c0_i32 : i32, i32
  }
}

</mosaic_0001>

<llo_original>
// kernel: _sublayer_connection.1
$region0: #{_sublayer_connection.1}
  #allocation0 [shape = 'u32[]', space=smem, size = 0x4, offset = 0x4, fixed_abs, tag = 'smem constant byte address 0x4 - core index']
  #allocation1 [shape = 'u32[72,128]{1,0:T(1,128)}', space=vmem, size = 0x9000, scoped, tag = 'internal scratch']
  #allocation2 [shape = 's32[1]{0}', space=sflag, size = 0x4, scoped, tag = 'scoped memory for _sublayer_connection.1']
  #allocation3 [shape = 's32[1]{0:T(128)S(6)}', space=smem, size = 0x200, scoped, tag = 'prefetched SMEM operand 0']
  %s0 = inlined_call_operand.<no memory space> [shape: s32[1], index: 0, kind: input, shape index: {}]
  %s1 = inlined_call_operand.vmem [shape: f32[128,128], index: 1, kind: input, shape index: {}]
  %s2 = inlined_call_operand.vmem [shape: f32[1,128], index: 2, kind: input, shape index: {}]
  %s3 = inlined_call_operand.vmem [shape: f32[1,128], index: 3, kind: input, shape index: {}]
  %s4 = inlined_call_operand.vmem [shape: bf16[128,128], index: 4, kind: input, shape index: {}]
  %s5 = inlined_call_operand.vmem [shape: f32[1,128], index: 5, kind: input, shape index: {}]
  %s6 = inlined_call_operand.hbm [shape: f32[128,128], index: 6, kind: output, shape index: {}]
  %s7 = sld [smem:[#allocation0]]
  $region30: #{_sublayer_connection.1} parent=0
    _
  %s9 = ssub.s32 1, %s7
  %s10 = scalar_select 0, %s9, %s7
  %11 = sst [smem:[#allocation3]] %s0
  $region1: #{_sublayer_connection.1} parent=0
    #allocation4 [shape = 'u8[65536]{0}', space=vmem, size = 0x10000, scoped, tag = 'output window, operand 0, single buffered']
    #allocation5 [shape = 's32[1]{0}', space=sflag, size = 0x4, scoped, tag = 'scoped memory for _sublayer_connection.1']
    %12 = vsyncpa [#allocation5], 0
    // Predicated region
    $region2: #{_sublayer_connection.1} parent=1 // pred_check
      _
    $region3: #{_sublayer_connection.1} parent=1 // pred_check_branch
      %14 = sbr.rel (0) target = $region5
    $region4: #{_sublayer_connection.1} parent=1 // pred_region
      _
    $region5: #{_sublayer_connection.1} parent=1 // pred_fallthru
      _
    // Predicated region
    $region6: #{_sublayer_connection.1} parent=1 // pred_check
      _
    $region7: #{_sublayer_connection.1} parent=1 // pred_check_branch
      %16 = sbr.rel (0) target = $region9
    $region8: #{_sublayer_connection.1} parent=1 // pred_region
      _
    $region9: #{_sublayer_connection.1} parent=1 // pred_fallthru
      _
    // Predicated region
    $region10: #{_sublayer_connection.1} parent=1 // pred_check
      _
    $region11: #{_sublayer_connection.1} parent=1 // pred_check_branch
      %18 = sbr.rel (0) target = $region13
    $region12: #{_sublayer_connection.1} parent=1 // pred_region
      _
    $region13: #{_sublayer_connection.1} parent=1 // pred_fallthru
      _
    // Predicated region
    $region14: #{_sublayer_connection.1} parent=1 // pred_check
      _
    $region15: #{_sublayer_connection.1} parent=1 // pred_check_branch
      %20 = sbr.rel (0) target = $region17
    $region16: #{_sublayer_connection.1} parent=1 // pred_region
      _
    $region17: #{_sublayer_connection.1} parent=1 // pred_fallthru
      _
    // Predicated region
    $region18: #{_sublayer_connection.1} parent=1 // pred_check
      _
    $region19: #{_sublayer_connection.1} parent=1 // pred_check_branch
      %22 = sbr.rel (0) target = $region21
    $region20: #{_sublayer_connection.1} parent=1 // pred_region
      _
    $region21: #{_sublayer_connection.1} parent=1 // pred_fallthru
      _
    %v23 = vld [vmem:[%s1] sm:$0xff]
    %v24 = vld [vmem:[%s1 + $0x8] sm:$0xff]
    %v25 = vld [vmem:[%s1 + $0x10] sm:$0xff]
    %v26 = vld [vmem:[%s1 + $0x18] sm:$0xff]
    %v27 = vld [vmem:[%s1 + $0x20] sm:$0xff]
    %v28 = vld [vmem:[%s1 + $0x28] sm:$0xff]
    %v29 = vld [vmem:[%s1 + $0x30] sm:$0xff]
    %v30 = vld [vmem:[%s1 + $0x38] sm:$0xff]
    %v31 = vld [vmem:[%s1 + $0x40] sm:$0xff]
    %v32 = vld [vmem:[%s1 + $0x48] sm:$0xff]
    %v33 = vld [vmem:[%s1 + $0x50] sm:$0xff]
    %v34 = vld [vmem:[%s1 + $0x58] sm:$0xff]
    %v35 = vld [vmem:[%s1 + $0x60] sm:$0xff]
    %v36 = vld [vmem:[%s1 + $0x68] sm:$0xff]
    %v37 = vld [vmem:[%s1 + $0x70] sm:$0xff]
    %v38 = vld [vmem:[%s1 + $0x78] sm:$0xff]
    %39 = vadd.xlane.f32.xlu0 %v23
    %v40 = vpop.xlane.xlu0 %39
    %41 = vadd.xlane.f32.xlu0 %v24
    %v42 = vpop.xlane.xlu0 %41
    %43 = vadd.xlane.f32.xlu0 %v25
    %v44 = vpop.xlane.xlu0 %43
    %45 = vadd.xlane.f32.xlu0 %v26
    %v46 = vpop.xlane.xlu0 %45
    %47 = vadd.xlane.f32.xlu0 %v27
    %v48 = vpop.xlane.xlu0 %47
    %49 = vadd.xlane.f32.xlu0 %v28
    %v50 = vpop.xlane.xlu0 %49
    %51 = vadd.xlane.f32.xlu0 %v29
    %v52 = vpop.xlane.xlu0 %51
    %53 = vadd.xlane.f32.xlu0 %v30
    %v54 = vpop.xlane.xlu0 %53
    %55 = vadd.xlane.f32.xlu0 %v31
    %v56 = vpop.xlane.xlu0 %55
    %57 = vadd.xlane.f32.xlu0 %v32
    %v58 = vpop.xlane.xlu0 %57
    %59 = vadd.xlane.f32.xlu0 %v33
    %v60 = vpop.xlane.xlu0 %59
    %61 = vadd.xlane.f32.xlu0 %v34
    %v62 = vpop.xlane.xlu0 %61
    %63 = vadd.xlane.f32.xlu0 %v35
    %v64 = vpop.xlane.xlu0 %63
    %65 = vadd.xlane.f32.xlu0 %v36
    %v66 = vpop.xlane.xlu0 %65
    %67 = vadd.xlane.f32.xlu0 %v37
    %v68 = vpop.xlane.xlu0 %67
    %69 = vadd.xlane.f32.xlu0 %v38
    %v70 = vpop.xlane.xlu0 %69
    %v71 = vrcp.pop 128.0
    %v72 = vmul.f32 128.0, %v71
    %v73 = vsub.f32 1.0, %v72
    %v74 = vmul.f32 %v71, %v73
    %v75 = vadd.f32 %v71, %v74
    %vm76 = vweird.f32 %v71
    %v77 = vsel %vm76, %v71, %v75
    %v78 = vmul.f32 %v40, %v77
    %v79 = vmul.f32 %v42, %v77
    %v80 = vmul.f32 %v44, %v77
    %v81 = vmul.f32 %v46, %v77
    %v82 = vmul.f32 %v48, %v77
    %v83 = vmul.f32 %v50, %v77
    %v84 = vmul.f32 %v52, %v77
    %v85 = vmul.f32 %v54, %v77
    %v86 = vmul.f32 %v56, %v77
    %v87 = vmul.f32 %v58, %v77
    %v88 = vmul.f32 %v60, %v77
    %v89 = vmul.f32 %v62, %v77
    %v90 = vmul.f32 %v64, %v77
    %v91 = vmul.f32 %v66, %v77
    %v92 = vmul.f32 %v68, %v77
    %v93 = vmul.f32 %v70, %v77
    %v94 = vsub.f32 %v23, %v78
    %v95 = vsub.f32 %v24, %v79
    %v96 = vsub.f32 %v25, %v80
    %v97 = vsub.f32 %v26, %v81
    %v98 = vsub.f32 %v27, %v82
    %v99 = vsub.f32 %v28, %v83
    %v100 = vsub.f32 %v29, %v84
    %v101 = vsub.f32 %v30, %v85
    %v102 = vsub.f32 %v31, %v86
    %v103 = vsub.f32 %v32, %v87
    %v104 = vsub.f32 %v33, %v88
    %v105 = vsub.f32 %v34, %v89
    %v106 = vsub.f32 %v35, %v90
    %v107 = vsub.f32 %v36, %v91
    %v108 = vsub.f32 %v37, %v92
    %v109 = vsub.f32 %v38, %v93
    %v110 = vmul.f32 %v94, %v94
    %v111 = vmul.f32 %v95, %v95
    %v112 = vmul.f32 %v96, %v96
    %v113 = vmul.f32 %v97, %v97
    %v114 = vmul.f32 %v98, %v98
    %v115 = vmul.f32 %v99, %v99
    %v116 = vmul.f32 %v100, %v100
    %v117 = vmul.f32 %v101, %v101
    %v118 = vmul.f32 %v102, %v102
    %v119 = vmul.f32 %v103, %v103
    %v120 = vmul.f32 %v104, %v104
    %v121 = vmul.f32 %v105, %v105
    %v122 = vmul.f32 %v106, %v106
    %v123 = vmul.f32 %v107, %v107
    %v124 = vmul.f32 %v108, %v108
    %v125 = vmul.f32 %v109, %v109
    %126 = vadd.xlane.f32.xlu0 %v110
    %v127 = vpop.xlane.xlu0 %126
    %128 = vadd.xlane.f32.xlu0 %v111
    %v129 = vpop.xlane.xlu0 %128
    %130 = vadd.xlane.f32.xlu0 %v112
    %v131 = vpop.xlane.xlu0 %130
    %132 = vadd.xlane.f32.xlu0 %v113
    %v133 = vpop.xlane.xlu0 %132
    %134 = vadd.xlane.f32.xlu0 %v114
    %v135 = vpop.xlane.xlu0 %134
    %136 = vadd.xlane.f32.xlu0 %v115
    %v137 = vpop.xlane.xlu0 %136
    %138 = vadd.xlane.f32.xlu0 %v116
    %v139 = vpop.xlane.xlu0 %138
    %140 = vadd.xlane.f32.xlu0 %v117
    %v141 = vpop.xlane.xlu0 %140
    %142 = vadd.xlane.f32.xlu0 %v118
    %v143 = vpop.xlane.xlu0 %142
    %144 = vadd.xlane.f32.xlu0 %v119
    %v145 = vpop.xlane.xlu0 %144
    %146 = vadd.xlane.f32.xlu0 %v120
    %v147 = vpop.xlane.xlu0 %146
    %148 = vadd.xlane.f32.xlu0 %v121
    %v149 = vpop.xlane.xlu0 %148
    %150 = vadd.xlane.f32.xlu0 %v122
    %v151 = vpop.xlane.xlu0 %150
    %152 = vadd.xlane.f32.xlu0 %v123
    %v153 = vpop.xlane.xlu0 %152
    %154 = vadd.xlane.f32.xlu0 %v124
    %v155 = vpop.xlane.xlu0 %154
    %156 = vadd.xlane.f32.xlu0 %v125
    %v157 = vpop.xlane.xlu0 %156
    %v158 = vmul.f32 %v127, %v77
    %v159 = vmul.f32 %v129, %v77
    %v160 = vmul.f32 %v131, %v77
    %v161 = vmul.f32 %v133, %v77
    %v162 = vmul.f32 %v135, %v77
    %v163 = vmul.f32 %v137, %v77
    %v164 = vmul.f32 %v139, %v77
    %v165 = vmul.f32 %v141, %v77
    %v166 = vmul.f32 %v143, %v77
    %v167 = vmul.f32 %v145, %v77
    %v168 = vmul.f32 %v147, %v77
    %v169 = vmul.f32 %v149, %v77
    %v170 = vmul.f32 %v151, %v77
    %v171 = vmul.f32 %v153, %v77
    %v172 = vmul.f32 %v155, %v77
    %v173 = vmul.f32 %v157, %v77
    %v174 = vadd.f32 %v158, 1e-05
    %v175 = vadd.f32 %v159, 1e-05
    %v176 = vadd.f32 %v160, 1e-05
    %v177 = vadd.f32 %v161, 1e-05
    %v178 = vadd.f32 %v162, 1e-05
    %v179 = vadd.f32 %v163, 1e-05
    %v180 = vadd.f32 %v164, 1e-05
    %v181 = vadd.f32 %v165, 1e-05
    %v182 = vadd.f32 %v166, 1e-05
    %v183 = vadd.f32 %v167, 1e-05
    %v184 = vadd.f32 %v168, 1e-05
    %v185 = vadd.f32 %v169, 1e-05
    %v186 = vadd.f32 %v170, 1e-05
    %v187 = vadd.f32 %v171, 1e-05
    %v188 = vadd.f32 %v172, 1e-05
    %v189 = vadd.f32 %v173, 1e-05
    %v190 = vrsqrt.pop %v174
    %v191 = vmul.f32 %v190, %v174
    %v192 = vmul.f32 %v191, %v190
    %v193 = vmul.f32 0.5, %v192
    %v194 = vsub.f32 1.5, %v193
    %v195 = vmul.f32 %v190, %v194
    %vm196 = vweird.f32 %v174
    %vm197 = vweird.f32 %v190
    %vm198 = vmor %vm196, %vm197
    %v199 = vsel %vm198, %v190, %v195
    %v200 = vrsqrt.pop %v175
    %v201 = vmul.f32 %v200, %v175
    %v202 = vmul.f32 %v201, %v200
    %v203 = vmul.f32 0.5, %v202
    %v204 = vsub.f32 1.5, %v203
    %v205 = vmul.f32 %v200, %v204
    %vm206 = vweird.f32 %v175
    %vm207 = vweird.f32 %v200
    %vm208 = vmor %vm206, %vm207
    %v209 = vsel %vm208, %v200, %v205
    %v210 = vrsqrt.pop %v176
    %v211 = vmul.f32 %v210, %v176
    %v212 = vmul.f32 %v211, %v210
    %v213 = vmul.f32 0.5, %v212
    %v214 = vsub.f32 1.5, %v213
    %v215 = vmul.f32 %v210, %v214
    %vm216 = vweird.f32 %v176
    %vm217 = vweird.f32 %v210
    %vm218 = vmor %vm216, %vm217
    %v219 = vsel %vm218, %v210, %v215
    %v220 = vrsqrt.pop %v177
    %v221 = vmul.f32 %v220, %v177
    %v222 = vmul.f32 %v221, %v220
    %v223 = vmul.f32 0.5, %v222
    %v224 = vsub.f32 1.5, %v223
    %v225 = vmul.f32 %v220, %v224
    %vm226 = vweird.f32 %v177
    %vm227 = vweird.f32 %v220
    %vm228 = vmor %vm226, %vm227
    %v229 = vsel %vm228, %v220, %v225
    %v230 = vrsqrt.pop %v178
    %v231 = vmul.f32 %v230, %v178
    %v232 = vmul.f32 %v231, %v230
    %v233 = vmul.f32 0.5, %v232
    %v234 = vsub.f32 1.5, %v233
    %v235 = vmul.f32 %v230, %v234
    %vm236 = vweird.f32 %v178
    %vm237 = vweird.f32 %v230
    %vm238 = vmor %vm236, %vm237
    %v239 = vsel %vm238, %v230, %v235
    %v240 = vrsqrt.pop %v179
    %v241 = vmul.f32 %v240, %v179
    %v242 = vmul.f32 %v241, %v240
    %v243 = vmul.f32 0.5, %v242
    %v244 = vsub.f32 1.5, %v243
    %v245 = vmul.f32 %v240, %v244
    %vm246 = vweird.f32 %v179
    %vm247 = vweird.f32 %v240
    %vm248 = vmor %vm246, %vm247
    %v249 = vsel %vm248, %v240, %v245
    %v250 = vrsqrt.pop %v180
    %v251 = vmul.f32 %v250, %v180
    %v252 = vmul.f32 %v251, %v250
    %v253 = vmul.f32 0.5, %v252
    %v254 = vsub.f32 1.5, %v253
    %v255 = vmul.f32 %v250, %v254
    %vm256 = vweird.f32 %v180
    %vm257 = vweird.f32 %v250
    %vm258 = vmor %vm256, %vm257
    %v259 = vsel %vm258, %v250, %v255
    %v260 = vrsqrt.pop %v181
    %v261 = vmul.f32 %v260, %v181
    %v262 = vmul.f32 %v261, %v260
    %v263 = vmul.f32 0.5, %v262
    %v264 = vsub.f32 1.5, %v263
    %v265 = vmul.f32 %v260, %v264
    %vm266 = vweird.f32 %v181
    %vm267 = vweird.f32 %v260
    %vm268 = vmor %vm266, %vm267
    %v269 = vsel %vm268, %v260, %v265
    %v270 = vrsqrt.pop %v182
    %v271 = vmul.f32 %v270, %v182
    %v272 = vmul.f32 %v271, %v270
    %v273 = vmul.f32 0.5, %v272
    %v274 = vsub.f32 1.5, %v273
    %v275 = vmul.f32 %v270, %v274
    %vm276 = vweird.f32 %v182
    %vm277 = vweird.f32 %v270
    %vm278 = vmor %vm276, %vm277
    %v279 = vsel %vm278, %v270, %v275
    %v280 = vrsqrt.pop %v183
    %v281 = vmul.f32 %v280, %v183
    %v282 = vmul.f32 %v281, %v280
    %v283 = vmul.f32 0.5, %v282
    %v284 = vsub.f32 1.5, %v283
    %v285 = vmul.f32 %v280, %v284
    %vm286 = vweird.f32 %v183
    %vm287 = vweird.f32 %v280
    %vm288 = vmor %vm286, %vm287
    %v289 = vsel %vm288, %v280, %v285
    %v290 = vrsqrt.pop %v184
    %v291 = vmul.f32 %v290, %v184
    %v292 = vmul.f32 %v291, %v290
    %v293 = vmul.f32 0.5, %v292
    %v294 = vsub.f32 1.5, %v293
    %v295 = vmul.f32 %v290, %v294
    %vm296 = vweird.f32 %v184
    %vm297 = vweird.f32 %v290
    %vm298 = vmor %vm296, %vm297
    %v299 = vsel %vm298, %v290, %v295
    %v300 = vrsqrt.pop %v185
    %v301 = vmul.f32 %v300, %v185
    %v302 = vmul.f32 %v301, %v300
    %v303 = vmul.f32 0.5, %v302
    %v304 = vsub.f32 1.5, %v303
    %v305 = vmul.f32 %v300, %v304
    %vm306 = vweird.f32 %v185
    %vm307 = vweird.f32 %v300
    %vm308 = vmor %vm306, %vm307
    %v309 = vsel %vm308, %v300, %v305
    %v310 = vrsqrt.pop %v186
    %v311 = vmul.f32 %v310, %v186
    %v312 = vmul.f32 %v311, %v310
    %v313 = vmul.f32 0.5, %v312
    %v314 = vsub.f32 1.5, %v313
    %v315 = vmul.f32 %v310, %v314
    %vm316 = vweird.f32 %v186
    %vm317 = vweird.f32 %v310
    %vm318 = vmor %vm316, %vm317
    %v319 = vsel %vm318, %v310, %v315
    %v320 = vrsqrt.pop %v187
    %v321 = vmul.f32 %v320, %v187
    %v322 = vmul.f32 %v321, %v320
    %v323 = vmul.f32 0.5, %v322
    %v324 = vsub.f32 1.5, %v323
    %v325 = vmul.f32 %v320, %v324
    %vm326 = vweird.f32 %v187
    %vm327 = vweird.f32 %v320
    %vm328 = vmor %vm326, %vm327
    %v329 = vsel %vm328, %v320, %v325
    %v330 = vrsqrt.pop %v188
    %v331 = vmul.f32 %v330, %v188
    %v332 = vmul.f32 %v331, %v330
    %v333 = vmul.f32 0.5, %v332
    %v334 = vsub.f32 1.5, %v333
    %v335 = vmul.f32 %v330, %v334
    %vm336 = vweird.f32 %v188
    %vm337 = vweird.f32 %v330
    %vm338 = vmor %vm336, %vm337
    %v339 = vsel %vm338, %v330, %v335
    %v340 = vrsqrt.pop %v189
    %v341 = vmul.f32 %v340, %v189
    %v342 = vmul.f32 %v341, %v340
    %v343 = vmul.f32 0.5, %v342
    %v344 = vsub.f32 1.5, %v343
    %v345 = vmul.f32 %v340, %v344
    %vm346 = vweird.f32 %v189
    %vm347 = vweird.f32 %v340
    %vm348 = vmor %vm346, %vm347
    %v349 = vsel %vm348, %v340, %v345
    %v350 = vmul.f32 %v94, %v199
    %v351 = vmul.f32 %v95, %v209
    %v352 = vmul.f32 %v96, %v219
    %v353 = vmul.f32 %v97, %v229
    %v354 = vmul.f32 %v98, %v239
    %v355 = vmul.f32 %v99, %v249
    %v356 = vmul.f32 %v100, %v259
    %v357 = vmul.f32 %v101, %v269
    %v358 = vmul.f32 %v102, %v279
    %v359 = vmul.f32 %v103, %v289
    %v360 = vmul.f32 %v104, %v299
    %v361 = vmul.f32 %v105, %v309
    %v362 = vmul.f32 %v106, %v319
    %v363 = vmul.f32 %v107, %v329
    %v364 = vmul.f32 %v108, %v339
    %v365 = vmul.f32 %v109, %v349
    %v366 = vld [vmem:[%s2] sm:$0x1]
    %v368 = vperm.slane %v366, 0
    %v370 = vmul.f32 %v350, %v368
    %v371 = vmul.f32 %v351, %v368
    %v372 = vmul.f32 %v352, %v368
    %v373 = vmul.f32 %v353, %v368
    %v374 = vmul.f32 %v354, %v368
    %v375 = vmul.f32 %v355, %v368
    %v376 = vmul.f32 %v356, %v368
    %v377 = vmul.f32 %v357, %v368
    %v378 = vmul.f32 %v358, %v368
    %v379 = vmul.f32 %v359, %v368
    %v380 = vmul.f32 %v360, %v368
    %v381 = vmul.f32 %v361, %v368
    %v382 = vmul.f32 %v362, %v368
    %v383 = vmul.f32 %v363, %v368
    %v384 = vmul.f32 %v364, %v368
    %v385 = vmul.f32 %v365, %v368
    %v386 = vld [vmem:[%s3] sm:$0x1]
    %v388 = vperm.slane %v386, 0
    %v390 = vadd.f32 %v370, %v388
    %v391 = vadd.f32 %v371, %v388
    %v392 = vadd.f32 %v372, %v388
    %v393 = vadd.f32 %v373, %v388
    %v394 = vadd.f32 %v374, %v388
    %v395 = vadd.f32 %v375, %v388
    %v396 = vadd.f32 %v376, %v388
    %v397 = vadd.f32 %v377, %v388
    %v398 = vadd.f32 %v378, %v388
    %v399 = vadd.f32 %v379, %v388
    %v400 = vadd.f32 %v380, %v388
    %v401 = vadd.f32 %v381, %v388
    %v402 = vadd.f32 %v382, %v388
    %v403 = vadd.f32 %v383, %v388
    %v404 = vadd.f32 %v384, %v388
    %v405 = vadd.f32 %v385, %v388
    %v406 = vpack.c.bf16 %v391, %v390
    %v407 = vpack.c.bf16 %v393, %v392
    %v408 = vpack.c.bf16 %v395, %v394
    %v409 = vpack.c.bf16 %v397, %v396
    %v410 = vpack.c.bf16 %v399, %v398
    %v411 = vpack.c.bf16 %v401, %v400
    %v412 = vpack.c.bf16 %v403, %v402
    %v413 = vpack.c.bf16 %v405, %v404
    %v414 = vld [vmem:[%s4] sm:$0xf]
    %v415 = vld [vmem:[%s4 + $0x4] sm:$0xf]
    %v416 = vld [vmem:[%s4 + $0x8] sm:$0xf]
    %v417 = vld [vmem:[%s4 + $0xc] sm:$0xf]
    %v418 = vld [vmem:[%s4 + $0x10] sm:$0xf]
    %v419 = vld [vmem:[%s4 + $0x14] sm:$0xf]
    %v420 = vld [vmem:[%s4 + $0x18] sm:$0xf]
    %v421 = vld [vmem:[%s4 + $0x1c] sm:$0xf]
    %v422 = vld [vmem:[%s4 + $0x20] sm:$0xf]
    %v423 = vld [vmem:[%s4 + $0x24] sm:$0xf]
    %v424 = vld [vmem:[%s4 + $0x28] sm:$0xf]
    %v425 = vld [vmem:[%s4 + $0x2c] sm:$0xf]
    %v426 = vld [vmem:[%s4 + $0x30] sm:$0xf]
    %v427 = vld [vmem:[%s4 + $0x34] sm:$0xf]
    %v428 = vld [vmem:[%s4 + $0x38] sm:$0xf]
    %v429 = vld [vmem:[%s4 + $0x3c] sm:$0xf]
    %v430 = vld [vmem:[%s5] sm:$0x1]
    %v432 = vperm.slane %v430, 0
    %v450 = vunpack.c.l.b16 %v414
    %v451 = vunpack.c.l.b16 %v415
    %v452 = vunpack.c.l.b16 %v416
    %v453 = vunpack.c.l.b16 %v417
    %v454 = vunpack.c.l.b16 %v418
    %v455 = vunpack.c.l.b16 %v419
    %v456 = vunpack.c.l.b16 %v420
    %v457 = vunpack.c.l.b16 %v421
    %v458 = vunpack.c.l.b16 %v422
    %v459 = vunpack.c.l.b16 %v423
    %v460 = vunpack.c.l.b16 %v424
    %v461 = vunpack.c.l.b16 %v425
    %v462 = vunpack.c.l.b16 %v426
    %v463 = vunpack.c.l.b16 %v427
    %v464 = vunpack.c.l.b16 %v428
    %v465 = vunpack.c.l.b16 %v429
    %v466 = vpack.c.b16 %v451, %v450
    %v467 = vpack.c.b16 %v453, %v452
    %v468 = vpack.c.b16 %v455, %v454
    %v469 = vpack.c.b16 %v457, %v456
    %v470 = vpack.c.b16 %v459, %v458
    %v471 = vpack.c.b16 %v461, %v460
    %v472 = vpack.c.b16 %v463, %v462
    %v473 = vpack.c.b16 %v465, %v464
    %482 = vmatpush.bf16.msra.mxu0 %v473
    %483 = vmatpush.bf16.msra.mxu0 %v472
    %484 = vmatpush.bf16.msra.mxu0 %v471
    %485 = vmatpush.bf16.msra.mxu0 %v470
    %486 = vmatpush.bf16.msra.mxu0 %v469
    %487 = vmatpush.bf16.msra.mxu0 %v468
    %488 = vmatpush.bf16.msra.mxu0 %v467
    %489 = vmatpush.bf16.msra.mxu0 %v466
    %490 = vmatmul.bf16.gmra.mxu0 %v406
    %v491 = vpop.f32.mrf.mxu0
    %v492 = vadd.f32 %v432, %v491
    %v493 = vpop.f32.mrf.mxu0
    %v494 = vadd.f32 %v432, %v493
    %495 = vmatmul.bf16.gmra.mxu0 %v407
    %v496 = vpop.f32.mrf.mxu0
    %v497 = vadd.f32 %v432, %v496
    %v498 = vpop.f32.mrf.mxu0
    %v499 = vadd.f32 %v432, %v498
    %500 = vmatmul.bf16.gmra.mxu0 %v408
    %v501 = vpop.f32.mrf.mxu0
    %v502 = vadd.f32 %v432, %v501
    %v503 = vpop.f32.mrf.mxu0
    %v504 = vadd.f32 %v432, %v503
    %505 = vmatmul.bf16.gmra.mxu0 %v409
    %v506 = vpop.f32.mrf.mxu0
    %v507 = vadd.f32 %v432, %v506
    %v508 = vpop.f32.mrf.mxu0
    %v509 = vadd.f32 %v432, %v508
    %510 = vmatmul.bf16.gmra.mxu0 %v410
    %v511 = vpop.f32.mrf.mxu0
    %v512 = vadd.f32 %v432, %v511
    %v513 = vpop.f32.mrf.mxu0
    %v514 = vadd.f32 %v432, %v513
    %515 = vmatmul.bf16.gmra.mxu0 %v411
    %v516 = vpop.f32.mrf.mxu0
    %v517 = vadd.f32 %v432, %v516
    %v518 = vpop.f32.mrf.mxu0
    %v519 = vadd.f32 %v432, %v518
    %520 = vmatmul.bf16.gmra.mxu0 %v412
    %v521 = vpop.f32.mrf.mxu0
    %v522 = vadd.f32 %v432, %v521
    %v523 = vpop.f32.mrf.mxu0
    %v524 = vadd.f32 %v432, %v523
    %525 = vmatmul.bf16.gmra.mxu0 %v413
    %v526 = vpop.f32.mrf.mxu0
    %v527 = vadd.f32 %v432, %v526
    %v528 = vpop.f32.mrf.mxu0
    %v529 = vadd.f32 %v432, %v528
    %530 = vdwg.mxu0
    %v531 = vadd.f32 %v23, %v492
    %v532 = vadd.f32 %v24, %v494
    %v533 = vadd.f32 %v25, %v497
    %v534 = vadd.f32 %v26, %v499
    %v535 = vadd.f32 %v27, %v502
    %v536 = vadd.f32 %v28, %v504
    %v537 = vadd.f32 %v29, %v507
    %v538 = vadd.f32 %v30, %v509
    %v539 = vadd.f32 %v31, %v512
    %v540 = vadd.f32 %v32, %v514
    %v541 = vadd.f32 %v33, %v517
    %v542 = vadd.f32 %v34, %v519
    %v543 = vadd.f32 %v35, %v522
    %v544 = vadd.f32 %v36, %v524
    %v545 = vadd.f32 %v37, %v527
    %v546 = vadd.f32 %v38, %v529
    %547 = vst [vmem:[#allocation4] sm:$0xff] %v531
    %548 = vst [vmem:[#allocation4 + $0x8] sm:$0xff] %v532
    %549 = vst [vmem:[#allocation4 + $0x10] sm:$0xff] %v533
    %550 = vst [vmem:[#allocation4 + $0x18] sm:$0xff] %v534
    %551 = vst [vmem:[#allocation4 + $0x20] sm:$0xff] %v535
    %552 = vst [vmem:[#allocation4 + $0x28] sm:$0xff] %v536
    %553 = vst [vmem:[#allocation4 + $0x30] sm:$0xff] %v537
    %554 = vst [vmem:[#allocation4 + $0x38] sm:$0xff] %v538
    %555 = vst [vmem:[#allocation4 + $0x40] sm:$0xff] %v539
    %556 = vst [vmem:[#allocation4 + $0x48] sm:$0xff] %v540
    %557 = vst [vmem:[#allocation4 + $0x50] sm:$0xff] %v541
    %558 = vst [vmem:[#allocation4 + $0x58] sm:$0xff] %v542
    %559 = vst [vmem:[#allocation4 + $0x60] sm:$0xff] %v543
    %560 = vst [vmem:[#allocation4 + $0x68] sm:$0xff] %v544
    %561 = vst [vmem:[#allocation4 + $0x70] sm:$0xff] %v545
    %562 = vst [vmem:[#allocation4 + $0x78] sm:$0xff] %v546
    // Predicated region
    $region22: #{_sublayer_connection.1} parent=1 // pred_check
      _
    $region23: #{_sublayer_connection.1} parent=1 // pred_check_branch
      %564 = sbr.rel (0) target = $region25
    $region24: #{_sublayer_connection.1} parent=1 // pred_region
      %566 = vsyncadd [#allocation5], 0
      %s567 = sshll.u32 [#allocation4], 4
      %s568 = int_to_ptr.vmem [resolvable:$true] %s567
      %s569 = sshll.u32 %s6, 4
      %s570 = int_to_ptr.hbm [resolvable:$true] %s569
      %575 = dma.vmem_to_hbm [thread:$0]  %s568, 2048, %s570, [#allocation5], 128, 128, 8
    $region25: #{_sublayer_connection.1} parent=1 // pred_fallthru
      _
    // Predicated region
    $region26: #{_sublayer_connection.1} parent=1 // pred_check
      _
    $region27: #{_sublayer_connection.1} parent=1 // pred_check_branch
      %577 = sbr.rel (0) target = $region29
    $region28: #{_sublayer_connection.1} parent=1 // pred_region
      %579 = dma.done [#allocation5], 2048
    $region29: #{_sublayer_connection.1} parent=1 // pred_fallthru
      _
    %580 = vsyncpa [#allocation5], 1

</llo_original>
